<compile_context>
chip_gen: v5e
topology: v5e:2x2
jax: 0.10.0
libtpu: 0.0.40
codegen_flags: <defaults>
</compile_context>

<pallas_src>
import jax
import jax.numpy as jnp
from jax.experimental import pallas as pl
from jax.experimental.pallas import tpu as pltpu

C_OUT = 8                      # conv1 out channels (only channel 0 is consumed)
KSIZE = 3                      # conv1 kernel size
IN_FEATS = 10                  # fc1 in_features
HIDDEN = 20                    # fc1 out / fc2 in
OUT_FEATS = 2                  # fc2 out_features
SLAB_ROWS = 2 * (IN_FEATS + 1)           # 22: image rows 0..1, cols 0..10

MAX_BATCH_TILE = 4096          # batch lanes per grid step
SINGLE_STEP_BATCH = 1024       # <= this: one grid step (cheapest for small N)
MIN_GRID_STEPS = 4             # large N: keep >=4 steps so v7x's 2 TCs share work


# ---------------------------------------------------------------------------
# Kernel (shared by 4-D and 2-D paths; batch on lanes)
# ---------------------------------------------------------------------------
def mlp_lanes_kernel(x_ref, w1_ref, b1_ref, w2_ref, b2_ref, o_ref):
    # x_ref : (F, BT)  VMEM  input slab^T (F = 22 conv-fold path, 10 linear path)
    # w1_ref: (20, F)  VMEM  first-layer weight (conv fold already applied)
    # b1_ref: (20, 1)  VMEM
    # w2_ref: (2, 20)  VMEM
    # b2_ref: (2, 1)   VMEM
    # o_ref : (2, BT)  VMEM  output^T (batch on lanes -> lane-dense store)
    x = x_ref[...].astype(jnp.float32)                       # in-kernel cast
    h = jnp.dot(w1_ref[...], x, preferred_element_type=jnp.float32) + b1_ref[...]
    h = jnp.maximum(h, 0.0)
    out = jnp.dot(w2_ref[...], h, preferred_element_type=jnp.float32) + b2_ref[...]
    o_ref[...] = out.astype(o_ref.dtype)


# ---------------------------------------------------------------------------
# Wrappers
# ---------------------------------------------------------------------------
def _batch_tile(n):
    if n <= SINGLE_STEP_BATCH:
        return n                               # block == full dim -> always legal
    bt = min(MAX_BATCH_TILE, pl.cdiv(n, MIN_GRID_STEPS))
    return ((bt + 127) // 128) * 128           # lane-multiple (last block dim)


def _mlp_call(x_t, w1, b1, w2, b2):
    """relu(w1 @ x_t + b1), then w2 @ . + b2, batch on lanes.  Returns (N, 2)."""
    f, n = x_t.shape
    bt = _batch_tile(n)
    out_t = pl.pallas_call(
        mlp_lanes_kernel,
        out_shape=jax.ShapeDtypeStruct((OUT_FEATS, n), jnp.float32),
        grid=(pl.cdiv(n, bt),),
        in_specs=[
            pl.BlockSpec((f, bt), lambda b: (0, b)),              # batch-tiled slab
            pl.BlockSpec((HIDDEN, f), lambda b: (0, 0)),          # resident weights
            pl.BlockSpec((HIDDEN, 1), lambda b: (0, 0)),
            pl.BlockSpec((OUT_FEATS, HIDDEN), lambda b: (0, 0)),
            pl.BlockSpec((OUT_FEATS, 1), lambda b: (0, 0)),
        ],
        out_specs=pl.BlockSpec((OUT_FEATS, bt), lambda b: (0, b)),
        compiler_params=pltpu.CompilerParams(
            dimension_semantics=("parallel",),
            # Explicit headroom (v5e's default scoped VMEM is only 16 MiB);
            # worst-case block footprint here is < 1 MiB even at bt=4096.
            vmem_limit_bytes=32 * 1024 * 1024),
    )(x_t, w1, b1, w2, b2)
    return out_t.T                                                # (N, 2)


def _forward_4d(x, prep):
    n, c, h, w = x.shape
    if c != 1 or h < 2 or w < IN_FEATS + 1:
        # TODO(synk): tiny-spatial / multi-channel fallback (first-10 flatten
        # spanning rows or channels) not implemented.
        raise NotImplementedError("fused conv+MLP path needs C==1, H>=2, W>=11")
    # Only conv channel 0 / row 0 / cols 0..9 feed fc1; they depend on image
    # rows 0..1, cols 0..10 only.  Build that slab^T (22, N) — batch on lanes —
    # with one fused slice+transpose+reshape; no pad, no conv output in HBM,
    # no astype (the kernel casts after the DMA).
    slab_t = jnp.transpose(x[:, 0, 0:2, 0:IN_FEATS + 1], (1, 2, 0)).reshape(SLAB_ROWS, n)
    return _mlp_call(slab_t, prep["w1_conv"], prep["b1_conv"], prep["w2"], prep["b2"])


def _forward_2d(x, prep):
    # (N, 10) -> (10, N): batch on lanes for lane-dense vregs and output store.
    return _mlp_call(x.T, prep["w1"], prep["b1"], prep["w2"], prep["b2"])


def simple_model_forward(x, prep):
    """SimpleModel.forward.  `prep` is the output of prepare_params()."""
    if x.ndim == 4:
        return _forward_4d(x, prep)
    if x.ndim == 2:
        return _forward_2d(x, prep)
    raise ValueError(f"unsupported input rank: {x.ndim}")


# ---------------------------------------------------------------------------
# Parameters
# ---------------------------------------------------------------------------
def init_params(key):
    """Deterministic PyTorch-style uniform(-1/sqrt(fan_in), 1/sqrt(fan_in))."""
    ks = jax.random.split(key, 6)

    def uni(k, shape, fan_in):
        bound = 1.0 / float(fan_in) ** 0.5
        return jax.random.uniform(k, shape, jnp.float32, -bound, bound)

    return {
        "conv_w": uni(ks[0], (C_OUT, 1, KSIZE, KSIZE), 1 * KSIZE * KSIZE),
        "conv_b": uni(ks[1], (C_OUT,), 1 * KSIZE * KSIZE),
        "fc1_w": uni(ks[2], (HIDDEN, IN_FEATS), IN_FEATS),
        "fc1_b": uni(ks[3], (HIDDEN,), IN_FEATS),
        "fc2_w": uni(ks[4], (OUT_FEATS, HIDDEN), HIDDEN),
        "fc2_b": uni(ks[5], (OUT_FEATS,), HIDDEN),
    }


def prepare_params(params):
    """One-time layout prep + conv->fc1 algebraic fold (hoisted out of forward)."""
    w1 = params["fc1_w"].astype(jnp.float32)                      # (20, 10)
    b1 = params["fc1_b"].astype(jnp.float32)                      # (20,)
    cw = params["conv_w"][0, 0].astype(jnp.float32).reshape(KSIZE * KSIZE)  # 9 taps, ch 0
    cb0 = params["conv_b"][0].astype(jnp.float32)

    # C (22, 10): conv features (pre-bias) = C^T @ slab^T, with slab row
    # r*11 + c holding x[., 0, r, c].  The c == -1 SAME-pad column is dropped
    # (zero contribution), and the padded image row -1 never contributes.
    rows, cols, taps = [], [], []
    for r in range(2):                          # image row r -> kernel row r+1
        for kw in range(KSIZE):
            for j in range(IN_FEATS):
                c = j + kw - 1                  # image column feeding output col j
                if c >= 0:
                    rows.append(r * (IN_FEATS + 1) + c)
                    cols.append(j)
                    taps.append((r + 1) * KSIZE + kw)
    C = jnp.zeros((SLAB_ROWS, IN_FEATS), jnp.float32)
    C = C.at[jnp.array(rows), jnp.array(cols)].add(cw[jnp.array(taps)])

    return {
        "w1_conv": w1 @ C.T,                                      # (20, 22)
        "b1_conv": (b1 + cb0 * w1.sum(axis=1)).reshape(HIDDEN, 1),
        "w1": w1,                                                 # (20, 10)
        "b1": b1.reshape(HIDDEN, 1),
        "w2": params["fc2_w"].astype(jnp.float32),                # (2, 20)
        "b2": params["fc2_b"].astype(jnp.float32).reshape(OUT_FEATS, 1),
    }


# ---------------------------------------------------------------------------
# Pure-JAX reference (identical semantics, for validation)
# ---------------------------------------------------------------------------
def reference_forward(x, params):
    if x.ndim == 4:
        c = jax.lax.conv_general_dilated(
            x, params["conv_w"], window_strides=(1, 1), padding="SAME",
            dimension_numbers=("NCHW", "OIHW", "NCHW"))
        c = c + params["conv_b"][None, :, None, None]
        feat = c.reshape(c.shape[0], -1)[:, :IN_FEATS]
    else:
        feat = x
    h = jnp.maximum(feat @ params["fc1_w"].T + params["fc1_b"], 0.0)
    return h @ params["fc2_w"].T + params["fc2_b"]


if __name__ == "__main__":
    key = jax.random.PRNGKey(0)
    k_params, k_x4, k_x2 = jax.random.split(key, 3)
    params = init_params(k_params)
    prep = prepare_params(params)            # done once, not per forward call

    fwd = jax.jit(simple_model_forward)

    # 4-D (conv) path: batch=2, channels=1, spatial=16x16
    x4 = jax.random.normal(k_x4, (2, 1, 16, 16), dtype=jnp.float32)
    out4 = jax.block_until_ready(fwd(x4, prep))
    ref4 = reference_forward(x4, params)

    # 2-D (linear-only) path: batch=2, features=10
    x2 = jax.random.normal(k_x2, (2, IN_FEATS), dtype=jnp.float32)
    out2 = jax.block_until_ready(fwd(x2, prep))
    ref2 = reference_forward(x2, params)

    assert out4.shape == (2, OUT_FEATS) and out2.shape == (2, OUT_FEATS)
    assert jnp.allclose(out4, ref4, atol=2e-3, rtol=2e-3)
    assert jnp.allclose(out2, ref2, atol=2e-3, rtol=2e-3)

    print("KERNEL_OK")
</pallas_src>

<mosaic_0001>
module attributes {stable_mosaic.version = 11 : i64} {
  func.func @mlp_lanes_kernel(%arg0: i32, %arg1: memref<22x2xf32, #tpu.memory_space<vmem>>, %arg2: memref<20x22xf32, #tpu.memory_space<vmem>>, %arg3: memref<20x1xf32, #tpu.memory_space<vmem>>, %arg4: memref<2x20xf32, #tpu.memory_space<vmem>>, %arg5: memref<2x1xf32, #tpu.memory_space<vmem>>, %arg6: memref<2x2xf32, #tpu.memory_space<vmem>>) attributes {dimension_semantics = [#tpu.dimension_semantics<parallel>], iteration_bounds = array<i64: 1>, scalar_prefetch = 0 : i64, scratch_operands = 0 : i64, tpu.core_type = #tpu.core_type<tc>, window_params = [{transform_indices = @transform_0, window_bounds = array<i64: 22, 2>}, {pipeline_mode = #tpu.pipeline_mode<synchronous>, transform_indices = @transform_1, window_bounds = array<i64: 20, 22>}, {pipeline_mode = #tpu.pipeline_mode<synchronous>, transform_indices = @transform_2, window_bounds = array<i64: 20, 1>}, {pipeline_mode = #tpu.pipeline_mode<synchronous>, transform_indices = @transform_3, window_bounds = array<i64: 2, 20>}, {pipeline_mode = #tpu.pipeline_mode<synchronous>, transform_indices = @transform_4, window_bounds = array<i64: 2, 1>}, {transform_indices = @transform_5, window_bounds = array<i64: 2, 2>}]} {
    %c0 = arith.constant 0 : index
    %c0_0 = arith.constant 0 : index
    %0 = vector.load %arg1[%c0, %c0_0] : memref<22x2xf32, #tpu.memory_space<vmem>>, vector<22x2xf32>
    %c0_1 = arith.constant 0 : index
    %c0_2 = arith.constant 0 : index
    %1 = vector.load %arg2[%c0_1, %c0_2] : memref<20x22xf32, #tpu.memory_space<vmem>>, vector<20x22xf32>
    %cst = arith.constant dense<0.000000e+00> : vector<20x2xf32>
    %2 = tpu.matmul %1, %0, %cst {dimension_numbers = #tpu.dot_dimension_numbers<[1], [0], [0], [1], [0, 0, 1, 1], [], []>} : vector<20x22xf32>, vector<22x2xf32>, vector<20x2xf32> -> vector<20x2xf32>
    %c0_3 = arith.constant 0 : index
    %c0_4 = arith.constant 0 : index
    %3 = vector.load %arg3[%c0_3, %c0_4] : memref<20x1xf32, #tpu.memory_space<vmem>>, vector<20x1xf32>
    %4 = vector.broadcast %3 : vector<20x1xf32> to vector<20x2xf32>
    %5 = arith.addf %2, %4 : vector<20x2xf32>
    %cst_5 = arith.constant 0.000000e+00 : f32
    %6 = vector.broadcast %cst_5 : f32 to vector<20x2xf32>
    %7 = arith.maximumf %5, %6 : vector<20x2xf32>
    %c0_6 = arith.constant 0 : index
    %c0_7 = arith.constant 0 : index
    %8 = vector.load %arg4[%c0_6, %c0_7] : memref<2x20xf32, #tpu.memory_space<vmem>>, vector<2x20xf32>
    %cst_8 = arith.constant dense<0.000000e+00> : vector<2x2xf32>
    %9 = tpu.matmul %8, %7, %cst_8 {dimension_numbers = #tpu.dot_dimension_numbers<[1], [0], [0], [1], [0, 0, 1, 1], [], []>} : vector<2x20xf32>, vector<20x2xf32>, vector<2x2xf32> -> vector<2x2xf32>
    %c0_9 = arith.constant 0 : index
    %c0_10 = arith.constant 0 : index
    %10 = vector.load %arg5[%c0_9, %c0_10] : memref<2x1xf32, #tpu.memory_space<vmem>>, vector<2x1xf32>
    %11 = vector.broadcast %10 : vector<2x1xf32> to vector<2x2xf32>
    %12 = arith.addf %9, %11 : vector<2x2xf32>
    %c0_11 = arith.constant 0 : index
    %c0_12 = arith.constant 0 : index
    %13 = vector.load %arg6[%c0_11, %c0_12] : memref<2x2xf32, #tpu.memory_space<vmem>>, vector<2x2xf32>
    tpu.vector_store %arg6[%c0_11, %c0_12], %12 {strides = array<i32>} : memref<2x2xf32, #tpu.memory_space<vmem>>, vector<2x2xf32>,
    return
  }
  func.func @transform_0(%arg0: i32) -> (i32, i32) {
    %c0_i32 = arith.constant 0 : i32
    %c0_i32_0 = arith.constant 0 : i32
    return %c0_i32, %arg0 : i32, i32
  }
  func.func @transform_1(%arg0: i32) -> (i32, i32) {
    %c0_i32 = arith.constant 0 : i32
    %c0_i32_0 = arith.constant 0 : i32
    %c0_i32_1 = arith.constant 0 : i32
    return %c0_i32, %c0_i32_0 : i32, i32
  }
  func.func @transform_2(%arg0: i32) -> (i32, i32) {
    %c0_i32 = arith.constant 0 : i32
    %c0_i32_0 = arith.constant 0 : i32
    %c0_i32_1 = arith.constant 0 : i32
    return %c0_i32, %c0_i32_0 : i32, i32
  }
  func.func @transform_3(%arg0: i32) -> (i32, i32) {
    %c0_i32 = arith.constant 0 : i32
    %c0_i32_0 = arith.constant 0 : i32
    %c0_i32_1 = arith.constant 0 : i32
    return %c0_i32, %c0_i32_0 : i32, i32
  }
  func.func @transform_4(%arg0: i32) -> (i32, i32) {
    %c0_i32 = arith.constant 0 : i32
    %c0_i32_0 = arith.constant 0 : i32
    %c0_i32_1 = arith.constant 0 : i32
    return %c0_i32, %c0_i32_0 : i32, i32
  }
  func.func @transform_5(%arg0: i32) -> (i32, i32) {
    %c0_i32 = arith.constant 0 : i32
    %c0_i32_0 = arith.constant 0 : i32
    return %c0_i32, %arg0 : i32, i32
  }
}

</mosaic_0001>

<llo_original>
// kernel: simple_model_forward.1
$region0: #{simple_model_forward.1}
  #allocation0 [shape = 'u32[]', space=smem, size = 0x4, offset = 0x4, fixed_abs, tag = 'smem constant byte address 0x4 - core index']
  #allocation1 [shape = 'u32[72,128]{1,0:T(1,128)}', space=vmem, size = 0x9000, scoped, tag = 'internal scratch']
  %s0 = inlined_call_operand.vmem [shape: f32[22,2], index: 0, kind: input, shape index: {}]
  %s1 = inlined_call_operand.vmem [shape: f32[20,22], index: 1, kind: input, shape index: {}]
  %s2 = inlined_call_operand.vmem [shape: f32[20,1], index: 2, kind: input, shape index: {}]
  %s3 = inlined_call_operand.vmem [shape: f32[2,20], index: 3, kind: input, shape index: {}]
  %s4 = inlined_call_operand.vmem [shape: f32[2,1], index: 4, kind: input, shape index: {}]
  %s5 = inlined_call_operand.vmem [shape: f32[2,2], index: 5, kind: output, shape index: {}]
  %s6 = sld [smem:[#allocation0]]
  $region30: #{simple_model_forward.1} parent=0
    _
  %s8 = ssub.s32 1, %s6
  %s9 = scalar_select 0, %s8, %s6
  // Predicated region
  $region2: #{simple_model_forward.1} parent=0 // pred_check
    _
  $region3: #{simple_model_forward.1} parent=0 // pred_check_branch
    %11 = sbr.rel (0) target = $region5
  $region4: #{simple_model_forward.1} parent=0 // pred_region
    _
  $region5: #{simple_model_forward.1} parent=0 // pred_fallthru
    _
  // Predicated region
  $region6: #{simple_model_forward.1} parent=0 // pred_check
    _
  $region7: #{simple_model_forward.1} parent=0 // pred_check_branch
    %13 = sbr.rel (0) target = $region9
  $region8: #{simple_model_forward.1} parent=0 // pred_region
    _
  $region9: #{simple_model_forward.1} parent=0 // pred_fallthru
    _
  // Predicated region
  $region10: #{simple_model_forward.1} parent=0 // pred_check
    _
  $region11: #{simple_model_forward.1} parent=0 // pred_check_branch
    %15 = sbr.rel (0) target = $region13
  $region12: #{simple_model_forward.1} parent=0 // pred_region
    _
  $region13: #{simple_model_forward.1} parent=0 // pred_fallthru
    _
  // Predicated region
  $region14: #{simple_model_forward.1} parent=0 // pred_check
    _
  $region15: #{simple_model_forward.1} parent=0 // pred_check_branch
    %17 = sbr.rel (0) target = $region17
  $region16: #{simple_model_forward.1} parent=0 // pred_region
    _
  $region17: #{simple_model_forward.1} parent=0 // pred_fallthru
    _
  // Predicated region
  $region18: #{simple_model_forward.1} parent=0 // pred_check
    _
  $region19: #{simple_model_forward.1} parent=0 // pred_check_branch
    %19 = sbr.rel (0) target = $region21
  $region20: #{simple_model_forward.1} parent=0 // pred_region
    _
  $region21: #{simple_model_forward.1} parent=0 // pred_fallthru
    _
  %v20 = vld [vmem:[%s0] sm:$0xff]
  %v21 = vld [vmem:[%s0 + $0x8] sm:$0xff]
  %v22 = vld [vmem:[%s0 + $0x10] sm:$0x3f]
  %v23 = vld [vmem:[%s1] sm:$0xff]
  %v24 = vld [vmem:[%s1 + $0x8] sm:$0xff]
  %v25 = vld [vmem:[%s1 + $0x10] sm:$0xf]
  %v26 = vld [vmem:[%s2] sm:$0xff]
  %v27 = vld [vmem:[%s2 + $0x8] sm:$0xff]
  %v28 = vld [vmem:[%s2 + $0x10] sm:$0xf]
  %30 = vset.pattern.permute.xlu0 0
  %31 = vperm.xlu0 %30, %v26
  %v32 = vpop.permute.xlu0 %31
  %35 = vset.pattern.permute.xlu0 0
  %36 = vperm.xlu0 %35, %v27
  %v37 = vpop.permute.xlu0 %36
  %40 = vset.pattern.permute.xlu0 0
  %41 = vperm.xlu0 %40, %v28
  %v42 = vpop.permute.xlu0 %41
  %vm44 = vcmask 179200
  %v46 = vsel %vm44, %v23, 0
  %v49 = vsel %vm44, %v24, 0
  %v52 = vsel %vm44, %v25, 0
  %vm54 = vcmask 1045504
  %v56 = vsel %vm54, %v22, 0
  %58 = vmatpush.msra.mxu0 0.0
  %59 = vmatpush.msra.mxu0 0.0
  %60 = vmatpush.msra.mxu0 0.0
  %61 = vmatpush.msra.mxu0 0.0
  %62 = vmatpush.msra.mxu0 0.0
  %63 = vmatpush.msra.mxu0 0.0
  %64 = vmatpush.msra.mxu0 0.0
  %65 = vmatpush.msra.mxu0 0.0
  %66 = vmatpush.msra.mxu0 0.0
  %67 = vmatpush.msra.mxu0 0.0
  %68 = vmatpush.msra.mxu0 0.0
  %69 = vmatpush.msra.mxu0 0.0
  %70 = vmatpush.msra.mxu0 0.0
  %71 = vmatpush.msra.mxu0 %v56
  %72 = vmatpush.msra.mxu0 %v21
  %73 = vmatpush.msra.mxu0 %v20
  %74 = vmatmul.f32.gmra.mxu0 %v46
  %v75 = vpop.f32.mrf.mxu0
  %v76 = vadd.f32 %v32, %v75
  %77 = vmatmul.f32.gmra.mxu0 %v49
  %v78 = vpop.f32.mrf.mxu0
  %v79 = vadd.f32 %v37, %v78
  %80 = vmatmul.f32.gmra.mxu0 %v52
  %v81 = vpop.f32.mrf.mxu0
  %v82 = vadd.f32 %v42, %v81
  %83 = vdwg.mxu0
  %v84 = vmax.f32 %v76, 0.0
  %v85 = vmax.f32 %v79, 0.0
  %v86 = vmax.f32 %v82, 0.0
  %v87 = vld [vmem:[%s3] sm:$0x3]
  %v88 = vld [vmem:[%s4] sm:$0x3]
  %90 = vset.pattern.permute.xlu0 0
  %91 = vperm.xlu0 %90, %v88
  %v92 = vpop.permute.xlu0 %91
  %vm94 = vcmask 162816
  %v96 = vsel %vm94, %v87, 0
  %vm98 = vcmask 1043456
  %v100 = vsel %vm98, %v86, 0
  %102 = vmatpush.msra.mxu0 0.0
  %103 = vmatpush.msra.mxu0 0.0
  %104 = vmatpush.msra.mxu0 0.0
  %105 = vmatpush.msra.mxu0 0.0
  %106 = vmatpush.msra.mxu0 0.0
  %107 = vmatpush.msra.mxu0 0.0
  %108 = vmatpush.msra.mxu0 0.0
  %109 = vmatpush.msra.mxu0 0.0
  %110 = vmatpush.msra.mxu0 0.0
  %111 = vmatpush.msra.mxu0 0.0
  %112 = vmatpush.msra.mxu0 0.0
  %113 = vmatpush.msra.mxu0 0.0
  %114 = vmatpush.msra.mxu0 0.0
  %115 = vmatpush.msra.mxu0 %v100
  %116 = vmatpush.msra.mxu0 %v85
  %117 = vmatpush.msra.mxu0 %v84
  %118 = vmatmul.f32.gmra.mxu0 %v96
  %v119 = vpop.f32.mrf.mxu0
  %v120 = vadd.f32 %v92, %v119
  %121 = vdwg.mxu0
  %vm122 = vcmask 9216
  %123 = vst.msk [vmem:[%s5] sm:$0x3] %vm122, %v120
  // Predicated region
  $region22: #{simple_model_forward.1} parent=0 // pred_check
    _
  $region23: #{simple_model_forward.1} parent=0 // pred_check_branch
    %125 = sbr.rel (0) target = $region25
  $region24: #{simple_model_forward.1} parent=0 // pred_region
    _
  $region25: #{simple_model_forward.1} parent=0 // pred_fallthru
    _
  // Predicated region
  $region26: #{simple_model_forward.1} parent=0 // pred_check
    _
  $region27: #{simple_model_forward.1} parent=0 // pred_check_branch
    %127 = sbr.rel (0) target = $region29
  $region28: #{simple_model_forward.1} parent=0 // pred_region
    _
  $region29: #{simple_model_forward.1} parent=0 // pred_fallthru
    _

</llo_original>
